<compile_context>
chip_gen: v5e
topology: v5e:2x2
jax: 0.10.0
libtpu: 0.0.40
codegen_flags: <defaults>
</compile_context>

<pallas_src>
import functools

import jax
import jax.numpy as jnp
from jax.experimental import pallas as pl
from jax.experimental.pallas import tpu as pltpu

BN_EPS = 1e-5

# A @ B^T dimension numbers (contract the trailing/lane axis of both operands).
_NT_DIMS = (((1,), (1,)), ((), ()))


def _pick_spatial_tile(hw, c, vmem_budget_bytes=4 << 20):
    """Largest spatial tile (lane axis) that divides H*W, is a multiple of 128,
    and keeps the double-buffered (C, TS) f32 input window within a small VMEM
    budget (portable down to v7x's 64 MiB physical VMEM)."""
    if hw % 128 != 0:
        return hw                       # block dim == full array dim is always legal
    bytes_per_lane = 2 * 4 * max(c, 8)  # double buffer * f32 * (sublane-padded) C
    ts = min(hw, max(128, (vmem_budget_bytes // bytes_per_lane) // 128 * 128))
    while hw % ts != 0:                 # stays a multiple of 128; terminates at 128
        ts -= 128
    return ts


def _global_head_kernel(x_ref, x00_ref, ws_ref, bs_ref, wh_ref, bh_ref,
                        out_ref, sum_acc, gram_acc, *, total_m):
    """Streaming BN-stat accumulation + fused heads.

    x_ref  : (1, C, TS) one batch element's spatial tile, channels on sublanes
    x00_ref: (N, C)     the spatial-(0,0) rows (what the heads actually read)
    ws_ref : (C, C)     shared 1x1 conv weight (in, out)
    bs_ref : (1, C)     shared conv bias
    wh_ref : (C, Apad)  concatenated, lane-padded head weights
    bh_ref : (1, Apad)  concatenated, lane-padded head biases
    out_ref: (N, Apad)  concatenated head outputs at spatial (0,0)
    sum_acc: (C, 1)     running sum of x per input channel   (VMEM scratch)
    gram_acc:(C, C)     running Gram  sum_p x_p x_p^T        (VMEM scratch)
    """
    n = pl.program_id(0)
    s = pl.program_id(1)

    @pl.when(jnp.logical_and(n == 0, s == 0))
    def _init():
        sum_acc[...] = jnp.zeros_like(sum_acc)
        gram_acc[...] = jnp.zeros_like(gram_acc)

    x = x_ref[0]                                               # (C, TS)
    sum_acc[...] += jnp.sum(x, axis=1, keepdims=True)          # (C, 1)
    gram_acc[...] += jax.lax.dot_general(                      # (C, C), K = TS on MXU
        x, x, _NT_DIMS, preferred_element_type=jnp.float32)

    last = jnp.logical_and(n == pl.num_programs(0) - 1,
                           s == pl.num_programs(1) - 1)

    @pl.when(last)
    def _finalize():
        ws = ws_ref[...]                                       # (C, C)
        bs = bs_ref[...]                                       # (1, C)
        inv_m = jnp.float32(1.0 / total_m)
        mean_x = sum_acc[...] * inv_m                          # (C, 1)  E[x]
        exx = gram_acc[...] * inv_m                            # (C, C)  E[x x^T]

        # BN batch statistics of y = x @ W + b, by linearity (no (M,C) pass):
        #   mean_y = E[x] @ W + b
        #   var_y  = diag(W^T E[x x^T] W) - (E[x] @ W)^2   (bias-free, biased var)
        mean_y0 = jnp.sum(ws * mean_x, axis=0, keepdims=True)  # (1, C)
        var_y = (jnp.sum(ws * jnp.dot(exx, ws, preferred_element_type=jnp.float32),
                         axis=0, keepdims=True)
                 - mean_y0 * mean_y0)                          # (1, C)
        var_y = jnp.maximum(var_y, 0.0)                        # guard fp cancellation
        inv_std = jax.lax.rsqrt(var_y + BN_EPS)

        # Shared conv + BN + ReLU only at the spatial-(0,0) rows the heads read.
        y00 = jnp.dot(x00_ref[...], ws, preferred_element_type=jnp.float32) + bs
        y00 = jnp.maximum((y00 - (mean_y0 + bs)) * inv_std, 0.0)

        # All heads fused into a single lane-dense matmul.
        out_ref[...] = (jnp.dot(y00, wh_ref[...], preferred_element_type=jnp.float32)
                        + bh_ref[...])


def global_head_forward(feat, params, sizes):
    """feat: (N, C, H, W) float32.  Returns (alpha_geom, alpha_tex, rot) like the
    PyTorch module: each head output has shape (N, head_size) (i.e. [:, :, 0, 0])."""
    N, C, H, W = feat.shape
    HW = H * W
    M = N * HW
    g, t, r = sizes
    A = g + t + r

    # Free, contiguous reshape: feature map is read from HBM once, by the kernel.
    x = feat.reshape(N, C, HW)
    x00 = feat[:, :, 0, 0]                                     # (N, C) tiny gather

    w_shared = params["w_shared"]                              # (C, C) (in, out)
    b_shared = params["b_shared"]                              # (1, C)
    w_heads = params["w_heads"]                                # (C, A)
    b_heads = params["b_heads"]                                # (1, A)

    # Lane-pad the concatenated head dim so output stores are unmasked.
    a_pad = max(128, ((A + 127) // 128) * 128)
    w_heads_p = jnp.pad(w_heads, ((0, 0), (0, a_pad - A)))
    b_heads_p = jnp.pad(b_heads, ((0, 0), (0, a_pad - A)))

    ts = _pick_spatial_tile(HW, C)
    s_tiles = HW // ts

    kernel = functools.partial(_global_head_kernel, total_m=float(M))

    out_p = pl.pallas_call(
        kernel,
        out_shape=jax.ShapeDtypeStruct((N, a_pad), jnp.float32),
        grid=(N, s_tiles),
        in_specs=[
            pl.BlockSpec((1, C, ts), lambda n, s: (n, 0, s)),  # streamed feature tiles
            pl.BlockSpec((N, C), lambda n, s: (0, 0)),
            pl.BlockSpec((C, C), lambda n, s: (0, 0)),
            pl.BlockSpec((1, C), lambda n, s: (0, 0)),
            pl.BlockSpec((C, a_pad), lambda n, s: (0, 0)),
            pl.BlockSpec((1, a_pad), lambda n, s: (0, 0)),
        ],
        out_specs=pl.BlockSpec((N, a_pad), lambda n, s: (0, 0)),
        scratch_shapes=[
            pltpu.VMEM((C, 1), jnp.float32),   # running per-channel sum of x
            pltpu.VMEM((C, C), jnp.float32),   # running Gram x x^T
        ],
        compiler_params=pltpu.CompilerParams(
            dimension_semantics=("arbitrary", "arbitrary")),   # both axes reduce
    )(x, x00, w_shared, b_shared, w_heads_p, b_heads_p)

    out = out_p[:, :A]

    # Split concatenated head outputs back into the PyTorch tuple.
    alpha_geom = out[:, :g] if g > 0 else jnp.zeros((N, 0), jnp.float32)
    alpha_tex = out[:, g:g + t] if t > 0 else None
    rot = out[:, g + t:g + t + r] if r > 0 else None
    return alpha_geom, alpha_tex, rot


def init_params(key, input_channels, alpha_geom_size, alpha_tex_size, camera_code_size):
    """Deterministic synthetic init matching conv1x1(init='normal0.01'):
    weight ~ N(0, 0.01), bias = 0.  Weights stored as (C_in, C_out)."""
    C = input_channels
    ks = jax.random.split(key, 4)
    w_shared = 0.01 * jax.random.normal(ks[0], (C, C), jnp.float32)
    b_shared = jnp.zeros((1, C), jnp.float32)
    w_geom = 0.01 * jax.random.normal(ks[1], (C, alpha_geom_size), jnp.float32)
    w_tex = 0.01 * jax.random.normal(ks[2], (C, alpha_tex_size), jnp.float32)
    w_rot = 0.01 * jax.random.normal(ks[3], (C, camera_code_size), jnp.float32)
    A = alpha_geom_size + alpha_tex_size + camera_code_size
    w_heads = jnp.concatenate([w_geom, w_tex, w_rot], axis=1)
    b_heads = jnp.zeros((1, A), jnp.float32)
    return {"w_shared": w_shared, "b_shared": b_shared,
            "w_heads": w_heads, "b_heads": b_heads}


def _reference(feat, params, sizes):
    """Pure-JAX reference of the PyTorch semantics (two-pass BN) for sanity check."""
    N, C, H, W = feat.shape
    x = jnp.transpose(feat, (0, 2, 3, 1)).reshape(N * H * W, C)
    y = x @ params["w_shared"] + params["b_shared"]
    mean = jnp.mean(y, axis=0, keepdims=True)
    var = jnp.mean(jnp.square(y - mean), axis=0, keepdims=True)
    y = jnp.maximum((y - mean) * jax.lax.rsqrt(var + BN_EPS), 0.0)
    y = y.reshape(N, H, W, C)[:, 0, 0, :]                      # [:, :, 0, 0] in NCHW
    out = y @ params["w_heads"] + params["b_heads"]
    g, t, r = sizes
    return out[:, :g], out[:, g:g + t], out[:, g + t:g + t + r]


if __name__ == "__main__":
    # Small shapes consistent with the module's forward.
    N, C, H, W = 2, 4, 16, 16
    alpha_geom_size, alpha_tex_size, camera_code_size = 3, 5, 6
    sizes = (alpha_geom_size, alpha_tex_size, camera_code_size)

    key = jax.random.PRNGKey(0)
    k_feat, k_params = jax.random.split(key)
    feat = jax.random.normal(k_feat, (N, C, H, W), jnp.float32)
    params = init_params(k_params, C, *sizes)

    alpha_geom, alpha_tex, rot = global_head_forward(feat, params, sizes)
    jax.block_until_ready((alpha_geom, alpha_tex, rot))

    # Sanity check against the pure-JAX reference.  The kernel computes the BN
    # variance via the Gram-matrix identity while the reference does a two-pass
    # variance on y = x @ W at XLA's default (reduced) f32 matmul precision, so
    # allow a slightly looser tolerance than bit-level.
    ref_g, ref_t, ref_r = _reference(feat, params, sizes)
    assert alpha_geom.shape == (N, alpha_geom_size)
    assert alpha_tex.shape == (N, alpha_tex_size)
    assert rot.shape == (N, camera_code_size)
    assert jnp.allclose(alpha_geom, ref_g, atol=1e-3, rtol=1e-3)
    assert jnp.allclose(alpha_tex, ref_t, atol=1e-3, rtol=1e-3)
    assert jnp.allclose(rot, ref_r, atol=1e-3, rtol=1e-3)

    print("KERNEL_OK")
</pallas_src>

<mosaic_0001>
module attributes {stable_mosaic.version = 11 : i64} {
  func.func @_global_head_kernel(%arg0: i32, %arg1: i32, %arg2: memref<1x4x256xf32, #tpu.memory_space<vmem>>, %arg3: memref<2x4xf32, #tpu.memory_space<vmem>>, %arg4: memref<4x4xf32, #tpu.memory_space<vmem>>, %arg5: memref<1x4xf32, #tpu.memory_space<vmem>>, %arg6: memref<4x128xf32, #tpu.memory_space<vmem>>, %arg7: memref<1x128xf32, #tpu.memory_space<vmem>>, %arg8: memref<2x128xf32, #tpu.memory_space<vmem>>, %arg9: memref<4x1xf32, #tpu.memory_space<vmem>>, %arg10: memref<4x4xf32, #tpu.memory_space<vmem>>) attributes {dimension_semantics = [#tpu.dimension_semantics<arbitrary>, #tpu.dimension_semantics<arbitrary>], iteration_bounds = array<i64: 2, 1>, scalar_prefetch = 0 : i64, scratch_operands = 2 : i64, tpu.core_type = #tpu.core_type<tc>, window_params = [{transform_indices = @transform_0, window_bounds = array<i64: 1, 4, 256>}, {pipeline_mode = #tpu.pipeline_mode<synchronous>, transform_indices = @transform_1, window_bounds = array<i64: 2, 4>}, {pipeline_mode = #tpu.pipeline_mode<synchronous>, transform_indices = @transform_2, window_bounds = array<i64: 4, 4>}, {pipeline_mode = #tpu.pipeline_mode<synchronous>, transform_indices = @transform_3, window_bounds = array<i64: 1, 4>}, {pipeline_mode = #tpu.pipeline_mode<synchronous>, transform_indices = @transform_4, window_bounds = array<i64: 4, 128>}, {pipeline_mode = #tpu.pipeline_mode<synchronous>, transform_indices = @transform_5, window_bounds = array<i64: 1, 128>}, {pipeline_mode = #tpu.pipeline_mode<synchronous>, transform_indices = @transform_6, window_bounds = array<i64: 2, 128>}]} {
    %c0_i32 = arith.constant 0 : i32
    %0 = arith.cmpi eq, %arg0, %c0_i32 : i32
    %c0_i32_0 = arith.constant 0 : i32
    %1 = arith.cmpi eq, %arg1, %c0_i32_0 : i32
    %2 = arith.andi %0, %1 : i1
    %3 = arith.extui %2 : i1 to i32
    %c0_i32_1 = arith.constant 0 : i32
    %4 = arith.cmpi ne, %3, %c0_i32_1 : i32
    scf.if %4 {
      %cst_15 = arith.constant 0.000000e+00 : f32
      %21 = vector.broadcast %cst_15 : f32 to vector<4x1xf32>
      %c0_16 = arith.constant 0 : index
      %c0_17 = arith.constant 0 : index
      %22 = vector.load %arg9[%c0_16, %c0_17] : memref<4x1xf32, #tpu.memory_space<vmem>>, vector<4x1xf32>
      tpu.vector_store %arg9[%c0_16, %c0_17], %21 {strides = array<i32>} : memref<4x1xf32, #tpu.memory_space<vmem>>, vector<4x1xf32>,
      %cst_18 = arith.constant 0.000000e+00 : f32
      %23 = vector.broadcast %cst_18 : f32 to vector<4x4xf32>
      %c0_19 = arith.constant 0 : index
      %c0_20 = arith.constant 0 : index
      %24 = vector.load %arg10[%c0_19, %c0_20] : memref<4x4xf32, #tpu.memory_space<vmem>>, vector<4x4xf32>
      tpu.vector_store %arg10[%c0_19, %c0_20], %23 {strides = array<i32>} : memref<4x4xf32, #tpu.memory_space<vmem>>, vector<4x4xf32>,
    } else {
    }
    %c0 = arith.constant 0 : index
    %c0_2 = arith.constant 0 : index
    %c0_3 = arith.constant 0 : index
    %5 = vector.load %arg2[%c0, %c0_2, %c0_3] : memref<1x4x256xf32, #tpu.memory_space<vmem>>, vector<1x4x256xf32>
    %6 = vector.shape_cast %5 : vector<1x4x256xf32> to vector<4x256xf32>
    %c0_4 = arith.constant 0 : index
    %c0_5 = arith.constant 0 : index
    %7 = vector.load %arg9[%c0_4, %c0_5] : memref<4x1xf32, #tpu.memory_space<vmem>>, vector<4x1xf32>
    %cst = arith.constant dense<0.000000e+00> : vector<4xf32>
    %8 = vector.multi_reduction <add>, %6, %cst [1] : vector<4x256xf32> to vector<4xf32>
    %9 = vector.shape_cast %8 : vector<4xf32> to vector<4x1xf32>
    %10 = arith.addf %7, %9 : vector<4x1xf32>
    %c0_6 = arith.constant 0 : index
    %c0_7 = arith.constant 0 : index
    %11 = vector.load %arg9[%c0_6, %c0_7] : memref<4x1xf32, #tpu.memory_space<vmem>>, vector<4x1xf32>
    tpu.vector_store %arg9[%c0_6, %c0_7], %10 {strides = array<i32>} : memref<4x1xf32, #tpu.memory_space<vmem>>, vector<4x1xf32>,
    %c0_8 = arith.constant 0 : index
    %c0_9 = arith.constant 0 : index
    %12 = vector.load %arg10[%c0_8, %c0_9] : memref<4x4xf32, #tpu.memory_space<vmem>>, vector<4x4xf32>
    %cst_10 = arith.constant dense<0.000000e+00> : vector<4x4xf32>
    %13 = tpu.matmul %6, %6, %cst_10 {dimension_numbers = #tpu.dot_dimension_numbers<[1], [1], [0], [0], [0, 0, 1, 0], [], []>} : vector<4x256xf32>, vector<4x256xf32>, vector<4x4xf32> -> vector<4x4xf32>
    %14 = arith.addf %12, %13 : vector<4x4xf32>
    %c0_11 = arith.constant 0 : index
    %c0_12 = arith.constant 0 : index
    %15 = vector.load %arg10[%c0_11, %c0_12] : memref<4x4xf32, #tpu.memory_space<vmem>>, vector<4x4xf32>
    tpu.vector_store %arg10[%c0_11, %c0_12], %14 {strides = array<i32>} : memref<4x4xf32, #tpu.memory_space<vmem>>, vector<4x4xf32>,
    %c1_i32 = arith.constant 1 : i32
    %16 = arith.cmpi eq, %arg0, %c1_i32 : i32
    %c0_i32_13 = arith.constant 0 : i32
    %17 = arith.cmpi eq, %arg1, %c0_i32_13 : i32
    %18 = arith.andi %16, %17 : i1
    %19 = arith.extui %18 : i1 to i32
    %c0_i32_14 = arith.constant 0 : i32
    %20 = arith.cmpi ne, %19, %c0_i32_14 : i32
    scf.if %20 {
      %c0_15 = arith.constant 0 : index
      %c0_16 = arith.constant 0 : index
      %21 = vector.load %arg4[%c0_15, %c0_16] : memref<4x4xf32, #tpu.memory_space<vmem>>, vector<4x4xf32>
      %c0_17 = arith.constant 0 : index
      %c0_18 = arith.constant 0 : index
      %22 = vector.load %arg5[%c0_17, %c0_18] : memref<1x4xf32, #tpu.memory_space<vmem>>, vector<1x4xf32>
      %c0_19 = arith.constant 0 : index
      %c0_20 = arith.constant 0 : index
      %23 = vector.load %arg9[%c0_19, %c0_20] : memref<4x1xf32, #tpu.memory_space<vmem>>, vector<4x1xf32>
      %cst_21 = arith.constant 0.001953125 : f32
      %24 = vector.broadcast %cst_21 : f32 to vector<4x1xf32>
      %25 = arith.mulf %23, %24 : vector<4x1xf32>
      %c0_22 = arith.constant 0 : index
      %c0_23 = arith.constant 0 : index
      %26 = vector.load %arg10[%c0_22, %c0_23] : memref<4x4xf32, #tpu.memory_space<vmem>>, vector<4x4xf32>
      %cst_24 = arith.constant 0.001953125 : f32
      %27 = vector.broadcast %cst_24 : f32 to vector<4x4xf32>
      %28 = arith.mulf %26, %27 : vector<4x4xf32>
      %29 = vector.broadcast %25 : vector<4x1xf32> to vector<4x4xf32>
      %30 = arith.mulf %21, %29 : vector<4x4xf32>
      %cst_25 = arith.constant dense<0.000000e+00> : vector<4xf32>
      %31 = vector.multi_reduction <add>, %30, %cst_25 [0] : vector<4x4xf32> to vector<4xf32>
      %32 = vector.shape_cast %31 : vector<4xf32> to vector<1x4xf32>
      %cst_26 = arith.constant dense<0.000000e+00> : vector<4x4xf32>
      %33 = tpu.matmul %28, %21, %cst_26 {dimension_numbers = #tpu.dot_dimension_numbers<[1], [0], [0], [1], [0, 0, 1, 1], [], []>} : vector<4x4xf32>, vector<4x4xf32>, vector<4x4xf32> -> vector<4x4xf32>
      %34 = arith.mulf %21, %33 : vector<4x4xf32>
      %cst_27 = arith.constant dense<0.000000e+00> : vector<4xf32>
      %35 = vector.multi_reduction <add>, %34, %cst_27 [0] : vector<4x4xf32> to vector<4xf32>
      %36 = vector.shape_cast %35 : vector<4xf32> to vector<1x4xf32>
      %37 = arith.mulf %32, %32 : vector<1x4xf32>
      %38 = arith.subf %36, %37 : vector<1x4xf32>
      %cst_28 = arith.constant 0.000000e+00 : f32
      %39 = vector.broadcast %cst_28 : f32 to vector<1x4xf32>
      %40 = arith.maximumf %38, %39 : vector<1x4xf32>
      %cst_29 = arith.constant 9.99999974E-6 : f32
      %41 = vector.broadcast %cst_29 : f32 to vector<1x4xf32>
      %42 = arith.addf %40, %41 : vector<1x4xf32>
      %43 = math.rsqrt %42 : vector<1x4xf32>
      %c0_30 = arith.constant 0 : index
      %c0_31 = arith.constant 0 : index
      %44 = vector.load %arg3[%c0_30, %c0_31] : memref<2x4xf32, #tpu.memory_space<vmem>>, vector<2x4xf32>
      %cst_32 = arith.constant dense<0.000000e+00> : vector<2x4xf32>
      %45 = tpu.matmul %44, %21, %cst_32 {dimension_numbers = #tpu.dot_dimension_numbers<[1], [0], [0], [1], [0, 0, 1, 1], [], []>} : vector<2x4xf32>, vector<4x4xf32>, vector<2x4xf32> -> vector<2x4xf32>
      %46 = vector.broadcast %22 : vector<1x4xf32> to vector<2x4xf32>
      %47 = arith.addf %45, %46 : vector<2x4xf32>
      %48 = arith.addf %32, %22 : vector<1x4xf32>
      %49 = vector.broadcast %48 : vector<1x4xf32> to vector<2x4xf32>
      %50 = arith.subf %47, %49 : vector<2x4xf32>
      %51 = vector.broadcast %43 : vector<1x4xf32> to vector<2x4xf32>
      %52 = arith.mulf %50, %51 : vector<2x4xf32>
      %cst_33 = arith.constant 0.000000e+00 : f32
      %53 = vector.broadcast %cst_33 : f32 to vector<2x4xf32>
      %54 = arith.maximumf %52, %53 : vector<2x4xf32>
      %c0_34 = arith.constant 0 : index
      %c0_35 = arith.constant 0 : index
      %55 = vector.load %arg6[%c0_34, %c0_35] : memref<4x128xf32, #tpu.memory_space<vmem>>, vector<4x128xf32>
      %cst_36 = arith.constant dense<0.000000e+00> : vector<2x128xf32>
      %56 = tpu.matmul %54, %55, %cst_36 {dimension_numbers = #tpu.dot_dimension_numbers<[1], [0], [0], [1], [0, 0, 1, 1], [], []>} : vector<2x4xf32>, vector<4x128xf32>, vector<2x128xf32> -> vector<2x128xf32>
      %c0_37 = arith.constant 0 : index
      %c0_38 = arith.constant 0 : index
      %57 = vector.load %arg7[%c0_37, %c0_38] : memref<1x128xf32, #tpu.memory_space<vmem>>, vector<1x128xf32>
      %58 = vector.broadcast %57 : vector<1x128xf32> to vector<2x128xf32>
      %59 = arith.addf %56, %58 : vector<2x128xf32>
      %c0_39 = arith.constant 0 : index
      %c0_40 = arith.constant 0 : index
      %60 = vector.load %arg8[%c0_39, %c0_40] : memref<2x128xf32, #tpu.memory_space<vmem>>, vector<2x128xf32>
      tpu.vector_store %arg8[%c0_39, %c0_40], %59 {strides = array<i32>} : memref<2x128xf32, #tpu.memory_space<vmem>>, vector<2x128xf32>,
    } else {
    }
    return
  }
  func.func @transform_0(%arg0: i32, %arg1: i32) -> (i32, i32, i32) {
    %c0_i32 = arith.constant 0 : i32
    %c0_i32_0 = arith.constant 0 : i32
    return %arg0, %c0_i32, %arg1 : i32, i32, i32
  }
  func.func @transform_1(%arg0: i32, %arg1: i32) -> (i32, i32) {
    %c0_i32 = arith.constant 0 : i32
    %c0_i32_0 = arith.constant 0 : i32
    %c0_i32_1 = arith.constant 0 : i32
    return %c0_i32, %c0_i32_0 : i32, i32
  }
  func.func @transform_2(%arg0: i32, %arg1: i32) -> (i32, i32) {
    %c0_i32 = arith.constant 0 : i32
    %c0_i32_0 = arith.constant 0 : i32
    %c0_i32_1 = arith.constant 0 : i32
    return %c0_i32, %c0_i32_0 : i32, i32
  }
  func.func @transform_3(%arg0: i32, %arg1: i32) -> (i32, i32) {
    %c0_i32 = arith.constant 0 : i32
    %c0_i32_0 = arith.constant 0 : i32
    %c0_i32_1 = arith.constant 0 : i32
    return %c0_i32, %c0_i32_0 : i32, i32
  }
  func.func @transform_4(%arg0: i32, %arg1: i32) -> (i32, i32) {
    %c0_i32 = arith.constant 0 : i32
    %c0_i32_0 = arith.constant 0 : i32
    %c0_i32_1 = arith.constant 0 : i32
    return %c0_i32, %c0_i32_0 : i32, i32
  }
  func.func @transform_5(%arg0: i32, %arg1: i32) -> (i32, i32) {
    %c0_i32 = arith.constant 0 : i32
    %c0_i32_0 = arith.constant 0 : i32
    %c0_i32_1 = arith.constant 0 : i32
    return %c0_i32, %c0_i32_0 : i32, i32
  }
  func.func @transform_6(%arg0: i32, %arg1: i32) -> (i32, i32) {
    %c0_i32 = arith.constant 0 : i32
    %c0_i32_0 = arith.constant 0 : i32
    %c0_i32_1 = arith.constant 0 : i32
    return %c0_i32, %c0_i32_0 : i32, i32
  }
}

</mosaic_0001>

<llo_original>
// kernel: tpu_custom_call.1
$region0: #{tpu_custom_call.1}
  #allocation0 [shape = 'u32[]', space=smem, size = 0x4, offset = 0x4, fixed_abs, tag = 'smem constant byte address 0x4 - core index']
  #allocation1 [shape = 'u32[72,128]{1,0:T(1,128)}', space=vmem, size = 0x9000, scoped, tag = 'internal scratch']
  #allocation2 [shape = 'f32[4,1]{1,0:T(4,128)}', space=vmem, size = 0x800, scoped, tag = 'scratch operand']
  #allocation3 [shape = 'f32[4,4]{1,0:T(4,128)}', space=vmem, size = 0x800, scoped, tag = 'scratch operand']
  %s0 = inlined_call_operand.hbm [shape: f32[2,4,256], index: 0, kind: input, shape index: {}]
  %s1 = inlined_call_operand.hbm [shape: f32[2,4], index: 1, kind: input, shape index: {}]
  %s2 = inlined_call_operand.hbm [shape: f32[4,4], index: 2, kind: input, shape index: {}]
  %s3 = inlined_call_operand.vmem [shape: f32[1,4], index: 3, kind: input, shape index: {}]
  %s4 = inlined_call_operand.hbm [shape: f32[4,128], index: 4, kind: input, shape index: {}]
  %s5 = inlined_call_operand.vmem [shape: f32[1,128], index: 5, kind: input, shape index: {}]
  %s6 = inlined_call_operand.hbm [shape: f32[2,128], index: 6, kind: output, shape index: {}]
  %s7 = sld [smem:[#allocation0]]
  $region81: #{tpu_custom_call.1} parent=0
    _
  %s9 = ssub.s32 1, %s7
  %s10 = scalar_select 0, %s9, %s7
  $region1: #{tpu_custom_call.1} parent=0
    #allocation4 [shape = 'u8[8192]{0}', space=vmem, size = 0x2000, scoped, tag = 'input window, operand 0']
    #allocation5 [shape = 's32[2]{0}', space=sflag, size = 0x8, scoped, tag = 'scoped memory for tpu_custom_call.1']
    #allocation6 [shape = 's32[2]{0}', space=sflag, size = 0x8, scoped, tag = 'scoped memory for tpu_custom_call.1']
    #allocation7 [shape = 'u8[1024]{0}', space=vmem, size = 0x400, scoped, tag = 'input window, operand 1, single buffered']
    #allocation8 [shape = 's32[1]{0}', space=sflag, size = 0x4, scoped, tag = 'scoped memory for tpu_custom_call.1']
    #allocation9 [shape = 'u8[2048]{0}', space=vmem, size = 0x800, scoped, tag = 'input window, operand 2, single buffered']
    #allocation10 [shape = 'u8[2048]{0}', space=vmem, size = 0x800, scoped, tag = 'input window, operand 4, single buffered']
    #allocation11 [shape = 's32[1]{0}', space=sflag, size = 0x4, scoped, tag = 'scoped memory for tpu_custom_call.1']
    #allocation12 [shape = 'u8[1024]{0}', space=vmem, size = 0x400, scoped, tag = 'output window, operand 0, single buffered']
    %11 = vsyncpa [#allocation5], 0
    %s12 = scalar_lea.sflag [#allocation5], 1
    %13 = vsyncpa %s12, 0
    %14 = vsyncpa [#allocation8], 0
    %15 = vsyncpa [#allocation11], 0
    %16 = vsyncpa [#allocation6], 0
    loop: start=0, step=1, limit=4
    $region2: #{tpu_custom_call.1} parent=1 // loop_pre_header
      _
    $region3: #{tpu_custom_call.1} parent=1 // loop_header
      %s18 = sphi 0, %s22
      %p19 = scmp.ge.s32.totalorder %s18, 4
      %s25 = sphi 0, %s37
      %s26 = sphi 0, %s33
      %s27 = sphi 0, %s25
      %s28 = sphi 0, %s26
      %s29 = sphi 0, %s27
      %s30 = sphi 0, %s28
      %s42 = sphi 0, %s44
      %s45 = sphi 0, %s42
      %s46 = sphi 0, %s45
      %s62 = sphi 0, %s46
      %s66 = sphi 0, %s66
      %s68 = sphi 0, %s66
      %s69 = sphi 0, %s68
      %s83 = sphi 0, %s69
      %s87 = sphi 0, %s87
      %s89 = sphi 0, %s87
      %s90 = sphi 0, %s89
      %s104 = sphi 0, %s90
      %s108 = sphi 0, %s108
      %s110 = sphi 0, %s108
      %s111 = sphi 0, %s110
      %s125 = sphi 0, %s111
      %s129 = sphi 0, %s129
      %s131 = sphi 0, %s129
      %s132 = sphi 0, %s131
      %s146 = sphi 0, %s132
      %s150 = sphi 0, %s150
      %s152 = sphi 0, %s150
      %s153 = sphi 0, %s152
      %s167 = sphi 0, %s153
      %s171 = sphi 0, %s171
      %s173 = sphi 0, %s171
      %s174 = sphi 0, %s173
      %s188 = sphi 0, %s174
    $region4: #{tpu_custom_call.1} parent=1 // loop_header_branch
      %21 = sbr.rel (%p19) target = $region8
    $region5: #{tpu_custom_call.1} parent=1 // loop_body
      %s23 = ssub.s32 %s18, 1
      %s24 = ssub.s32 %s18, 2
      %s31 = sadd.s32 1, %s26
      %p32 = scmp.ge.s32.totalorder %s31, 1
      %s33 = scalar_select %p32, 0, %s31
      %s34 = sadd.s32 1, %s25
      %s35 = scalar_select %p32, %s34, %s25
      %p36 = scmp.ge.s32.totalorder %s35, 2
      %s37 = scalar_select %p36, 0, %s35
      %s38 = ssub.s32 %s25, %s37
      %s39 = ssub.s32 %s26, %s33
      %s40 = sor.u32 %s38, %s39
      %p41 = scmp.eq.s32.totalorder %s40, 0
      %s43 = sadd.s32 %s42, 1
      %s44 = scalar_select %p41, %s42, %s43
      %p47 = pneg %p41
      %p48 = scmp.eq.s32.totalorder %s18, 1
      %p49 = por %p47, %p48
      %p50 = scmp.ne.s32.totalorder %s42, %s45
      %p51 = scmp.eq.s32.totalorder %s18, 0
      %p52 = por %p50, %p51
      %p53 = scmp.ne.s32.totalorder %s42, %s45
      %p54 = scmp.eq.s32.totalorder %s23, 1
      %p55 = por %p53, %p54
      %p56 = scmp.ne.s32.totalorder %s45, %s46
      %p57 = scmp.eq.s32.totalorder %s23, 0
      %p58 = por %p56, %p57
      %p59 = scmp.ne.s32.totalorder %s45, %s46
      %p60 = scmp.eq.s32.totalorder %s24, 1
      %p61 = por %p59, %p60
      %p63 = scmp.ne.s32.totalorder %s46, %s62
      %p64 = scmp.eq.s32.totalorder %s24, 0
      %p65 = por %p63, %p64
      %s67 = sadd.s32 %s66, 1
      %p70 = scmp.eq.s32.totalorder %s18, 1
      %p71 = scmp.ne.s32.totalorder %s66, %s68
      %p72 = scmp.eq.s32.totalorder %s18, 0
      %p73 = por %p71, %p72
      %p74 = scmp.ne.s32.totalorder %s66, %s68
      %p75 = scmp.eq.s32.totalorder %s23, 1
      %p76 = por %p74, %p75
      %p77 = scmp.ne.s32.totalorder %s68, %s69
      %p78 = scmp.eq.s32.totalorder %s23, 0
      %p79 = por %p77, %p78
      %p80 = scmp.ne.s32.totalorder %s68, %s69
      %p81 = scmp.eq.s32.totalorder %s24, 1
      %p82 = por %p80, %p81
      %p84 = scmp.ne.s32.totalorder %s69, %s83
      %p85 = scmp.eq.s32.totalorder %s24, 0
      %p86 = por %p84, %p85
      %s88 = sadd.s32 %s87, 1
      %p91 = scmp.eq.s32.totalorder %s18, 1
      %p92 = scmp.ne.s32.totalorder %s87, %s89
      %p93 = scmp.eq.s32.totalorder %s18, 0
      %p94 = por %p92, %p93
      %p95 = scmp.ne.s32.totalorder %s87, %s89
      %p96 = scmp.eq.s32.totalorder %s23, 1
      %p97 = por %p95, %p96
      %p98 = scmp.ne.s32.totalorder %s89, %s90
      %p99 = scmp.eq.s32.totalorder %s23, 0
      %p100 = por %p98, %p99
      %p101 = scmp.ne.s32.totalorder %s89, %s90
      %p102 = scmp.eq.s32.totalorder %s24, 1
      %p103 = por %p101, %p102
      %p105 = scmp.ne.s32.totalorder %s90, %s104
      %p106 = scmp.eq.s32.totalorder %s24, 0
      %p107 = por %p105, %p106
      %s109 = sadd.s32 %s108, 1
      %p112 = scmp.eq.s32.totalorder %s18, 1
      %p113 = scmp.ne.s32.totalorder %s108, %s110
      %p114 = scmp.eq.s32.totalorder %s18, 0
      %p115 = por %p113, %p114
      %p116 = scmp.ne.s32.totalorder %s108, %s110
      %p117 = scmp.eq.s32.totalorder %s23, 1
      %p118 = por %p116, %p117
      %p119 = scmp.ne.s32.totalorder %s110, %s111
      %p120 = scmp.eq.s32.totalorder %s23, 0
      %p121 = por %p119, %p120
      %p122 = scmp.ne.s32.totalorder %s110, %s111
      %p123 = scmp.eq.s32.totalorder %s24, 1
      %p124 = por %p122, %p123
      %p126 = scmp.ne.s32.totalorder %s111, %s125
      %p127 = scmp.eq.s32.totalorder %s24, 0
      %p128 = por %p126, %p127
      %s130 = sadd.s32 %s129, 1
      %p133 = scmp.eq.s32.totalorder %s18, 1
      %p134 = scmp.ne.s32.totalorder %s129, %s131
      %p135 = scmp.eq.s32.totalorder %s18, 0
      %p136 = por %p134, %p135
      %p137 = scmp.ne.s32.totalorder %s129, %s131
      %p138 = scmp.eq.s32.totalorder %s23, 1
      %p139 = por %p137, %p138
      %p140 = scmp.ne.s32.totalorder %s131, %s132
      %p141 = scmp.eq.s32.totalorder %s23, 0
      %p142 = por %p140, %p141
      %p143 = scmp.ne.s32.totalorder %s131, %s132
      %p144 = scmp.eq.s32.totalorder %s24, 1
      %p145 = por %p143, %p144
      %p147 = scmp.ne.s32.totalorder %s132, %s146
      %p148 = scmp.eq.s32.totalorder %s24, 0
      %p149 = por %p147, %p148
      %s151 = sadd.s32 %s150, 1
      %p154 = scmp.eq.s32.totalorder %s18, 1
      %p155 = scmp.ne.s32.totalorder %s150, %s152
      %p156 = scmp.eq.s32.totalorder %s18, 0
      %p157 = por %p155, %p156
      %p158 = scmp.ne.s32.totalorder %s150, %s152
      %p159 = scmp.eq.s32.totalorder %s23, 1
      %p160 = por %p158, %p159
      %p161 = scmp.ne.s32.totalorder %s152, %s153
      %p162 = scmp.eq.s32.totalorder %s23, 0
      %p163 = por %p161, %p162
      %p164 = scmp.ne.s32.totalorder %s152, %s153
      %p165 = scmp.eq.s32.totalorder %s24, 1
      %p166 = por %p164, %p165
      %p168 = scmp.ne.s32.totalorder %s153, %s167
      %p169 = scmp.eq.s32.totalorder %s24, 0
      %p170 = por %p168, %p169
      %s172 = sadd.s32 %s171, 1
      %p175 = scmp.eq.s32.totalorder %s18, 1
      %p176 = scmp.ne.s32.totalorder %s171, %s173
      %p177 = scmp.eq.s32.totalorder %s18, 0
      %p178 = por %p176, %p177
      %p179 = scmp.ne.s32.totalorder %s171, %s173
      %p180 = scmp.eq.s32.totalorder %s23, 1
      %p181 = por %p179, %p180
      %p182 = scmp.ne.s32.totalorder %s173, %s174
      %p183 = scmp.eq.s32.totalorder %s23, 0
      %p184 = por %p182, %p183
      %p185 = scmp.ne.s32.totalorder %s173, %s174
      %p186 = scmp.eq.s32.totalorder %s24, 1
      %p187 = por %p185, %p186
      %p189 = scmp.ne.s32.totalorder %s174, %s188
      %p190 = scmp.eq.s32.totalorder %s24, 0
      %p191 = por %p189, %p190
      %p192 = scmp.le.s32.totalorder 1, %s18
      %p193 = scmp.lt.s32.totalorder %s18, 3
      %p194 = pnand %p192, %p193
      %p195 = pneg %p194
      // Predicated region
      $region9: #{tpu_custom_call.1} parent=5 // pred_check
        _
      $region10: #{tpu_custom_call.1} parent=5 // pred_check_branch
        %197 = sbr.rel (%p194) target = $region12
      $region11: #{tpu_custom_call.1} parent=5 // pred_region
        %s198 = ssub.s32 %s18, 1
        // Predicated region
        $region13: #{tpu_custom_call.1} parent=11 // pred_check
          %p199 = pneg %p79
        $region14: #{tpu_custom_call.1} parent=11 // pred_check_branch
          %201 = sbr.rel (%p199) target = $region16
        $region15: #{tpu_custom_call.1} parent=11 // pred_region
          %203 = vsyncadd [#allocation8], 0
          %s205 = sshll.u32 %s1, 4
          %s206 = int_to_ptr.hbm [resolvable:$true] %s205
          %s207 = sshll.u32 [#allocation7], 4
          %s208 = int_to_ptr.vmem [resolvable:$true] %s207
          %210 = dma.hbm_to_vmem [thread:$0]  %s206, 32, %s208, [#allocation8]
        $region16: #{tpu_custom_call.1} parent=11 // pred_fallthru
          _
        // Predicated region
        $region17: #{tpu_custom_call.1} parent=11 // pred_check
          %p211 = pneg %p100
        $region18: #{tpu_custom_call.1} parent=11 // pred_check_branch
          %213 = sbr.rel (%p211) target = $region20
        $region19: #{tpu_custom_call.1} parent=11 // pred_region
          %215 = vsyncadd [#allocation8], 0
          %s217 = sshll.u32 %s2, 4
          %s218 = int_to_ptr.hbm [resolvable:$true] %s217
          %s219 = sshll.u32 [#allocation9], 4
          %s220 = int_to_ptr.vmem [resolvable:$true] %s219
          %222 = dma.hbm_to_vmem [thread:$0]  %s218, 64, %s220, [#allocation8]
        $region20: #{tpu_custom_call.1} parent=11 // pred_fallthru
          _
        // Predicated region
        $region21: #{tpu_custom_call.1} parent=11 // pred_check
          %p223 = pneg %p121
        $region22: #{tpu_custom_call.1} parent=11 // pred_check_branch
          %225 = sbr.rel (%p223) target = $region24
        $region23: #{tpu_custom_call.1} parent=11 // pred_region
          _
        $region24: #{tpu_custom_call.1} parent=11 // pred_fallthru
          _
        // Predicated region
        $region25: #{tpu_custom_call.1} parent=11 // pred_check
          %p226 = pneg %p142
        $region26: #{tpu_custom_call.1} parent=11 // pred_check_branch
          %228 = sbr.rel (%p226) target = $region28
        $region27: #{tpu_custom_call.1} parent=11 // pred_region
          %230 = vsyncadd [#allocation11], 0
          %s232 = sshll.u32 %s4, 4
          %s233 = int_to_ptr.hbm [resolvable:$true] %s232
          %s234 = sshll.u32 [#allocation10], 4
          %s235 = int_to_ptr.vmem [resolvable:$true] %s234
          %237 = dma.hbm_to_vmem [thread:$0]  %s233, 64, %s235, [#allocation11]
        $region28: #{tpu_custom_call.1} parent=11 // pred_fallthru
          _
        // Predicated region
        $region29: #{tpu_custom_call.1} parent=11 // pred_check
          %p238 = pneg %p163
        $region30: #{tpu_custom_call.1} parent=11 // pred_check_branch
          %240 = sbr.rel (%p238) target = $region32
        $region31: #{tpu_custom_call.1} parent=11 // pred_region
          _
        $region32: #{tpu_custom_call.1} parent=11 // pred_fallthru
          _
      $region12: #{tpu_custom_call.1} parent=5 // pred_fallthru
        _
      %p241 = scmp.lt.s32.totalorder %s18, 2
      // Predicated region
      $region33: #{tpu_custom_call.1} parent=5 // pred_check
        %p242 = pneg %p241
      $region34: #{tpu_custom_call.1} parent=5 // pred_check_branch
        %244 = sbr.rel (%p242) target = $region36
      $region35: #{tpu_custom_call.1} parent=5 // pred_region
        // Predicated region
        $region37: #{tpu_custom_call.1} parent=35 // pred_check
          %p245 = pneg %p52
        $region38: #{tpu_custom_call.1} parent=35 // pred_check_branch
          %247 = sbr.rel (%p245) target = $region40
        $region39: #{tpu_custom_call.1} parent=35 // pred_region
          %s248 = sand.u32 %s42, 1
          %s249 = scalar_lea.sflag [#allocation5], %s248
          %s250 = sand.u32 %s42, 1
          %s251 = smul.addr %s250, 8
          %s252 = scalar_lea.vmem [#allocation4], %s251
          %s253 = smul.u32 2, %s26
          %255 = vsyncadd %s249, 0
          %s256 = smul.addr %s25, 2
          %s257 = sadd.s32 %s253, %s256
          %s258 = smul.addr %s257, 4
          %s259 = scalar_lea.hbm %s0, %s258
          %s261 = sshll.u32 %s259, 4
          %s262 = int_to_ptr.hbm [resolvable:$true] %s261
          %s263 = sshll.u32 %s252, 4
          %s264 = int_to_ptr.vmem [resolvable:$true] %s263
          %266 = dma.hbm_to_vmem [thread:$0]  %s262, 128, %s264, %s249
        $region40: #{tpu_custom_call.1} parent=35 // pred_fallthru
          _
      $region36: #{tpu_custom_call.1} parent=5 // pred_fallthru
        _
      %p267 = scmp.le.s32.totalorder 1, %s18
      %p268 = scmp.lt.s32.totalorder %s18, 3
      %p269 = pnand %p267, %p268
      %p270 = pneg %p269
      // Predicated region
      $region41: #{tpu_custom_call.1} parent=5 // pred_check
        _
      $region42: #{tpu_custom_call.1} parent=5 // pred_check_branch
        %272 = sbr.rel (%p269) target = $region44
      $region43: #{tpu_custom_call.1} parent=5 // pred_region
        %s273 = ssub.s32 %s18, 1
        %s274 = sand.u32 %s45, 1
        %s275 = scalar_lea.sflag [#allocation5], %s274
        %s276 = sand.u32 %s45, 1
        %s277 = smul.addr %s276, 8
        %s278 = scalar_lea.vmem [#allocation4], %s277
        // Predicated region
        $region45: #{tpu_custom_call.1} parent=43 // pred_check
          %p279 = pneg %p58
        $region46: #{tpu_custom_call.1} parent=43 // pred_check_branch
          %281 = sbr.rel (%p279) target = $region48
        $region47: #{tpu_custom_call.1} parent=43 // pred_region
          %283 = dma.done %s275, 128
        $region48: #{tpu_custom_call.1} parent=43 // pred_fallthru
          _
        // Predicated region
        $region49: #{tpu_custom_call.1} parent=43 // pred_check
          %p284 = pneg %p79
        $region50: #{tpu_custom_call.1} parent=43 // pred_check_branch
          %286 = sbr.rel (%p284) target = $region52
        $region51: #{tpu_custom_call.1} parent=43 // pred_region
          %288 = dma.done [#allocation8], 32
        $region52: #{tpu_custom_call.1} parent=43 // pred_fallthru
          _
        // Predicated region
        $region53: #{tpu_custom_call.1} parent=43 // pred_check
          %p289 = pneg %p100
        $region54: #{tpu_custom_call.1} parent=43 // pred_check_branch
          %291 = sbr.rel (%p289) target = $region56
        $region55: #{tpu_custom_call.1} parent=43 // pred_region
          %293 = dma.done [#allocation8], 64
        $region56: #{tpu_custom_call.1} parent=43 // pred_fallthru
          _
        // Predicated region
        $region57: #{tpu_custom_call.1} parent=43 // pred_check
          %p294 = pneg %p142
        $region58: #{tpu_custom_call.1} parent=43 // pred_check_branch
          %296 = sbr.rel (%p294) target = $region60
        $region59: #{tpu_custom_call.1} parent=43 // pred_region
          %298 = dma.done [#allocation11], 64
        $region60: #{tpu_custom_call.1} parent=43 // pred_fallthru
          _
        %s299 = sand.u32 %s45, 1
        %s300 = scalar_lea.sflag [#allocation5], %s299
        %s301 = sand.u32 %s45, 1
        %s302 = smul.addr %s301, 8
        %s303 = scalar_lea.vmem [#allocation4], %s302
        %p304 = pneg %p58
        %p305 = pneg %p55
        %p306 = pneg %p79
        %p307 = pneg %p76
        %p308 = pneg %p100
        %p309 = pneg %p97
        %p310 = pneg %p121
        %p311 = pneg %p118
        %p312 = pneg %p142
        %p313 = pneg %p139
        %p314 = pneg %p163
        %p315 = pneg %p160
        %p316 = pneg %p184
        %p317 = pneg %p181
        %s318 = smul.u32 2, %s28
        %p319 = scmp.eq.s32.totalorder %s27, 0
        %p320 = scmp.eq.s32.totalorder %s28, 0
        %p321 = pnand %p319, %p320
        %p322 = pneg %p321
        // Predicated region
        $region61: #{tpu_custom_call.1} parent=43 // pred_check
          _
        $region62: #{tpu_custom_call.1} parent=43 // pred_check_branch
          %324 = sbr.rel (%p321) target = $region64
        $region63: #{tpu_custom_call.1} parent=43 // pred_region
          %vm325 = vcmask 3072
          %326 = vst.msk [vmem:[#allocation2] sm:$0xf] %vm325, 0.0
          %vm327 = vcmask 27648
          %328 = vst.msk [vmem:[#allocation3] sm:$0xf] %vm327, 0.0
        $region64: #{tpu_custom_call.1} parent=43 // pred_fallthru
          _
        %v329 = vld [vmem:[%s278] sm:$0xff]
        %v330 = vld [vmem:[#allocation2] sm:$0xf]
        %332 = vst [vmem:[#allocation1] ss:$2 sm:$0xff] %v329
        %v333 = vld.sshfl [vmem:[#allocation1] sm:$0xff pattern:$0x75316420]
        %v334 = vld.sshfl [vmem:[#allocation1 + $0x8] sm:$0xff pattern:$0x75316420]
        %vm337 = vcmask 1043456
        %v338 = vsel %vm337, %v333, 0.0
        %v339 = vsel %vm337, %v334, 0.0
        %v340 = vadd.f32 %v338, %v339
        %341 = vadd.xlane.f32.xlu0 %v340
        %v342 = vpop.xlane.xlu0 %341
        %v343 = vadd.f32 %v330, %v342
        %vm344 = vcmask 3072
        %345 = vst.msk [vmem:[#allocation2] sm:$0xf] %vm344, %v343
        %v346 = vld [vmem:[#allocation3] sm:$0xf]
        %347 = vst [vmem:[#allocation1] ss:$2 sm:$0xff] %v329
        %v348 = vld.sshfl [vmem:[#allocation1] sm:$0xff pattern:$0x75316420]
        %v349 = vld.sshfl [vmem:[#allocation1 + $0x8] sm:$0xff pattern:$0x75316420]
        %352 = vst [vmem:[#allocation1] ss:$2 sm:$0xff] %v329
        %v353 = vld.sshfl [vmem:[#allocation1] sm:$0xff pattern:$0x75316420]
        %v354 = vld.sshfl [vmem:[#allocation1 + $0x8] sm:$0xff pattern:$0x75316420]
        %357 = vmatpush.xpose.msra.mxu0 0.0
        %358 = vmatpush.xpose.msra.mxu0 0.0
        %359 = vmatpush.xpose.msra.mxu0 0.0
        %360 = vmatpush.xpose.msra.mxu0 0.0
        %361 = vmatpush.xpose.msra.mxu0 0.0
        %362 = vmatpush.xpose.msra.mxu0 0.0
        %363 = vmatpush.xpose.msra.mxu0 0.0
        %364 = vmatpush.xpose.msra.mxu0 0.0
        %365 = vmatpush.xpose.msra.mxu0 0.0
        %366 = vmatpush.xpose.msra.mxu0 0.0
        %367 = vmatpush.xpose.msra.mxu0 0.0
        %368 = vmatpush.xpose.msra.mxu0 0.0
        %369 = vmatpush.xpose.msra.mxu0 0.0
        %370 = vmatpush.xpose.msra.mxu0 0.0
        %371 = vmatpush.xpose.msra.mxu0 0.0
        %372 = vmatpush.xpose.msra.mxu0 %v353
        %373 = vmatmul.f32.gmra.mxu0 %v348
        %v374 = vpop.f32.mrf.mxu0
        %v375 = vadd.f32 0.0, %v374
        %376 = vdwg.mxu0
        %377 = vmatpush.xpose.msra.mxu0 0.0
        %378 = vmatpush.xpose.msra.mxu0 0.0
        %379 = vmatpush.xpose.msra.mxu0 0.0
        %380 = vmatpush.xpose.msra.mxu0 0.0
        %381 = vmatpush.xpose.msra.mxu0 0.0
        %382 = vmatpush.xpose.msra.mxu0 0.0
        %383 = vmatpush.xpose.msra.mxu0 0.0
        %384 = vmatpush.xpose.msra.mxu0 0.0
        %385 = vmatpush.xpose.msra.mxu0 0.0
        %386 = vmatpush.xpose.msra.mxu0 0.0
        %387 = vmatpush.xpose.msra.mxu0 0.0
        %388 = vmatpush.xpose.msra.mxu0 0.0
        %389 = vmatpush.xpose.msra.mxu0 0.0
        %390 = vmatpush.xpose.msra.mxu0 0.0
        %391 = vmatpush.xpose.msra.mxu0 0.0
        %392 = vmatpush.xpose.msra.mxu0 %v354
        %393 = vmatmul.f32.gmra.mxu0 %v349
        %v394 = vpop.f32.mrf.mxu0
        %v395 = vadd.f32 %v375, %v394
        %396 = vdwg.mxu0
        %v397 = vadd.f32 %v346, %v395
        %vm398 = vcmask 27648
        %399 = vst.msk [vmem:[#allocation3] sm:$0xf] %vm398, %v397
        %p400 = scmp.eq.s32.totalorder %s27, 1
        %p401 = pnand %p400, %p320
        %p402 = pneg %p401
        // Predicated region
        $region65: #{tpu_custom_call.1} parent=43 // pred_check
          _
        $region66: #{tpu_custom_call.1} parent=43 // pred_check_branch
          %404 = sbr.rel (%p401) target = $region68
        $region67: #{tpu_custom_call.1} parent=43 // pred_region
          %v405 = vld [vmem:[#allocation9] sm:$0xf]
          %v406 = vld [vmem:[%s3] sm:$0x1]
          %v407 = vld [vmem:[#allocation2] sm:$0xf]
          %v408 = vmul.f32 %v407, 0.001953125
          %v409 = vld [vmem:[#allocation3] sm:$0xf]
          %v410 = vmul.f32 %v409, 0.001953125
          %412 = vset.pattern.permute.xlu0 0
          %413 = vperm.xlu0 %412, %v408
          %v414 = vpop.permute.xlu0 %413
          %v416 = vmul.f32 %v405, %v414
          %v417 = vsel %vm398, %v416, 0.0
          %v418 = vrot.slane %v417, 4
          %v419 = vadd.f32 %v417, %v418
          %v420 = vrot.slane %v419, 2
          %v421 = vadd.f32 %v419, %v420
          %v422 = vrot.slane %v421, 1
          %v423 = vadd.f32 %v421, %v422
          %vm424 = vcmask 31744
          %v426 = vsel %vm424, %v410, 0
          %v429 = vsel %vm337, %v405, 0
          %431 = vmatpush.msra.mxu0 0.0
          %432 = vmatpush.msra.mxu0 0.0
          %433 = vmatpush.msra.mxu0 0.0
          %434 = vmatpush.msra.mxu0 0.0
          %435 = vmatpush.msra.mxu0 0.0
          %436 = vmatpush.msra.mxu0 0.0
          %437 = vmatpush.msra.mxu0 0.0
          %438 = vmatpush.msra.mxu0 0.0
          %439 = vmatpush.msra.mxu0 0.0
          %440 = vmatpush.msra.mxu0 0.0
          %441 = vmatpush.msra.mxu0 0.0
          %442 = vmatpush.msra.mxu0 0.0
          %443 = vmatpush.msra.mxu0 0.0
          %444 = vmatpush.msra.mxu0 0.0
          %445 = vmatpush.msra.mxu0 0.0
          %446 = vmatpush.msra.mxu0 %v429
          %447 = vmatmul.f32.gmra.mxu0 %v426
          %v448 = vpop.f32.mrf.mxu0
          %v449 = vadd.f32 0.0, %v448
          %450 = vdwg.mxu0
          %v451 = vmul.f32 %v405, %v449
          %v452 = vsel %vm398, %v451, 0.0
          %v453 = vrot.slane %v452, 4
          %v454 = vadd.f32 %v452, %v453
          %v455 = vrot.slane %v454, 2
          %v456 = vadd.f32 %v454, %v455
          %v457 = vrot.slane %v456, 1
          %v458 = vadd.f32 %v456, %v457
          %v459 = vmul.f32 %v423, %v423
          %v460 = vsub.f32 %v458, %v459
          %v461 = vmax.f32 %v460, 0.0
          %v462 = vadd.f32 %v461, 1e-05
          %v463 = vrsqrt.pop %v462
          %v464 = vmul.f32 %v463, %v462
          %v465 = vmul.f32 %v464, %v463
          %v466 = vmul.f32 0.5, %v465
          %v467 = vsub.f32 1.5, %v466
          %v468 = vmul.f32 %v463, %v467
          %vm469 = vweird.f32 %v462
          %vm470 = vweird.f32 %v463
          %vm471 = vmor %vm469, %vm470
          %v472 = vsel %vm471, %v463, %v468
          %v473 = vld [vmem:[#allocation7] sm:$0x3]
          %v475 = vperm.slane %v406, 0
          %v478 = vsel %vm424, %v473, 0
          %480 = vmatpush.msra.mxu0 0.0
          %481 = vmatpush.msra.mxu0 0.0
          %482 = vmatpush.msra.mxu0 0.0
          %483 = vmatpush.msra.mxu0 0.0
          %484 = vmatpush.msra.mxu0 0.0
          %485 = vmatpush.msra.mxu0 0.0
          %486 = vmatpush.msra.mxu0 0.0
          %487 = vmatpush.msra.mxu0 0.0
          %488 = vmatpush.msra.mxu0 0.0
          %489 = vmatpush.msra.mxu0 0.0
          %490 = vmatpush.msra.mxu0 0.0
          %491 = vmatpush.msra.mxu0 0.0
          %492 = vmatpush.msra.mxu0 0.0
          %493 = vmatpush.msra.mxu0 0.0
          %494 = vmatpush.msra.mxu0 0.0
          %495 = vmatpush.msra.mxu0 %v429
          %496 = vmatmul.f32.gmra.mxu0 %v478
          %v497 = vpop.f32.mrf.mxu0
          %v498 = vadd.f32 %v475, %v497
          %499 = vdwg.mxu0
          %v500 = vadd.f32 %v423, %v406
          %v501 = vperm.slane %v500, 0
          %v502 = vsub.f32 %v498, %v501
          %v503 = vmul.f32 %v502, %v472
          %v504 = vmax.f32 %v503, 0.0
          %v505 = vld [vmem:[#allocation10] sm:$0xf]
          %v506 = vld [vmem:[%s5] sm:$0x1]
          %v508 = vperm.slane %v506, 0
          %v511 = vsel %vm424, %v504, 0
          %v514 = vsel %vm337, %v505, 0
          %516 = vmatpush.msra.mxu0 0.0
          %517 = vmatpush.msra.mxu0 0.0
          %518 = vmatpush.msra.mxu0 0.0
          %519 = vmatpush.msra.mxu0 0.0
          %520 = vmatpush.msra.mxu0 0.0
          %521 = vmatpush.msra.mxu0 0.0
          %522 = vmatpush.msra.mxu0 0.0
          %523 = vmatpush.msra.mxu0 0.0
          %524 = vmatpush.msra.mxu0 0.0
          %525 = vmatpush.msra.mxu0 0.0
          %526 = vmatpush.msra.mxu0 0.0
          %527 = vmatpush.msra.mxu0 0.0
          %528 = vmatpush.msra.mxu0 0.0
          %529 = vmatpush.msra.mxu0 0.0
          %530 = vmatpush.msra.mxu0 0.0
          %531 = vmatpush.msra.mxu0 %v514
          %532 = vmatmul.f32.gmra.mxu0 %v511
          %v533 = vpop.f32.mrf.mxu0
          %v534 = vadd.f32 %v508, %v533
          %535 = vdwg.mxu0
          %536 = vst [vmem:[#allocation12] sm:$0x3] %v534
        $region68: #{tpu_custom_call.1} parent=43 // pred_fallthru
          _
        // Predicated region
        $region69: #{tpu_custom_call.1} parent=43 // pred_check
          %p537 = pneg %p181
        $region70: #{tpu_custom_call.1} parent=43 // pred_check_branch
          %539 = sbr.rel (%p537) target = $region72
        $region71: #{tpu_custom_call.1} parent=43 // pred_region
          %541 = vsyncadd [#allocation6], 0
          %s543 = sshll.u32 [#allocation12], 4
          %s544 = int_to_ptr.vmem [resolvable:$true] %s543
          %s545 = sshll.u32 %s6, 4
          %s546 = int_to_ptr.hbm [resolvable:$true] %s545
          %548 = dma.vmem_to_hbm [thread:$0]  %s544, 32, %s546, [#allocation6]
        $region72: #{tpu_custom_call.1} parent=43 // pred_fallthru
          _
        // Predicated region
        $region73: #{tpu_custom_call.1} parent=43 // pred_check
          %p549 = pneg %p181
        $region74: #{tpu_custom_call.1} parent=43 // pred_check_branch
          %551 = sbr.rel (%p549) target = $region76
        $region75: #{tpu_custom_call.1} parent=43 // pred_region
          %553 = dma.done [#allocation6], 32
        $region76: #{tpu_custom_call.1} parent=43 // pred_fallthru
          _
      $region44: #{tpu_custom_call.1} parent=5 // pred_fallthru
        _
      %p554 = scmp.le.s32.totalorder 2, %s18
      // Predicated region
      $region77: #{tpu_custom_call.1} parent=5 // pred_check
        %p555 = pneg %p554
      $region78: #{tpu_custom_call.1} parent=5 // pred_check_branch
        %557 = sbr.rel (%p555) target = $region80
      $region79: #{tpu_custom_call.1} parent=5 // pred_region
        %s558 = ssub.s32 %s18, 2
      $region80: #{tpu_custom_call.1} parent=5 // pred_fallthru
        _
    $region6: #{tpu_custom_call.1} parent=1 // loop_footer
      %s22 = sadd.s32 1, %s18
    $region7: #{tpu_custom_call.1} parent=1 // loop_footer_branch
      %17 = sbr.rel target = $region3
    $region8: #{tpu_custom_call.1} parent=1 // loop_exit
      _
    %559 = vsyncpa [#allocation5], 1
    %s560 = scalar_lea.sflag [#allocation5], 1
    %561 = vsyncpa %s560, 1
    %562 = vsyncpa [#allocation8], 1
    %563 = vsyncpa [#allocation11], 1
    %564 = vsyncpa [#allocation6], 1
    %s565 = scalar_lea.sflag [#allocation6], 1
    %566 = vsyncpa %s565, 1

</llo_original>
